<compile_context>
chip_gen: v7x
topology: tpu7x:2x2x1
jax: 0.10.0
libtpu: 0.0.40
codegen_flags: <defaults>
</compile_context>

<pallas_src>
import functools

import jax
import jax.numpy as jnp
from jax import lax
from jax.experimental import pallas as pl
from jax.experimental.pallas import tpu as pltpu


# ---------------------------------------------------------------------------
# Fused partial-conv kernel: one grid step == one image.
# ---------------------------------------------------------------------------
def _partial_conv_kernel(x_ref, m_ref, wband_ref, oband_ref, bcast_ref, b_ref,
                         out_ref, nmask_ref, xp_ref, mp_ref,
                         *, H, WC, Ho, Wo, Cout, K, pad):
    # x_ref, m_ref : (1, H, W*Cin)           input / mask (lane-flattened W,Cin)
    # wband_ref    : (K, W*Cin, Wo*Cout)     banded conv weights (one per kernel row)
    # oband_ref    : (W*Cin, Wo)             banded all-ones weights (mask conv)
    # bcast_ref    : (Wo, Wo*Cout)           per-pixel -> per-(pixel,chan) lane broadcast
    # b_ref        : (1, Wo*Cout)            bias tiled over output pixels
    # out_ref      : (1, Ho, Wo*Cout)        lane-dense output slab
    # nmask_ref    : (1, Ho, Wo)             per-pixel updated mask
    # xp_ref/mp_ref: (H+2*pad, W*Cin)        scratch: row-padded x*mask / mask
    x = x_ref[0].astype(jnp.float32)
    m = m_ref[0].astype(jnp.float32)

    # Row halo only; horizontal zero padding is encoded in the band matrices.
    # Zeroed every step (2*pad tiny rows per buffer) because each core's
    # scratch persists but may never see program_id == 0 under megacore split.
    if pad > 0:
        zrow = jnp.zeros((pad, WC), jnp.float32)
        xp_ref[0:pad, :] = zrow
        xp_ref[pad + H:pad + H + pad, :] = zrow
        mp_ref[0:pad, :] = zrow
        mp_ref[pad + H:pad + H + pad, :] = zrow
    xp_ref[pad:pad + H, :] = x * m
    mp_ref[pad:pad + H, :] = m

    # Masked conv: K lane-dense MXU dots, contraction W*Cin, f32 accumulation.
    acc = jnp.zeros((Ho, Wo * Cout), jnp.float32)
    mrows = jnp.zeros((Ho, WC), jnp.float32)
    for dh in range(K):
        acc = acc + jnp.dot(xp_ref[dh:dh + Ho, :], wband_ref[dh],
                            preferred_element_type=jnp.float32)
        mrows = mrows + mp_ref[dh:dh + Ho, :]      # VPU row-tap sum (mask conv)

    # All-ones "mask conv": one small dot sums over (kw, Cin) and applies the
    # horizontal zero padding -> per-pixel window count.            (Ho, Wo)
    msum = jnp.dot(mrows, oband_ref[...], preferred_element_type=jnp.float32)

    holes = msum == 0.0
    nonhole = jnp.where(holes, 0.0, 1.0)                            # (Ho, Wo)
    # One reciprocal per pixel instead of Cout divides per pixel.
    scale = nonhole * pl.reciprocal(jnp.where(holes, 1.0, msum), approx=False)
    # Broadcast per-pixel scale across the Cout lane groups with one tiny dot
    # so the epilogue math and the output store stay lane-dense.
    scale_d = jnp.dot(scale, bcast_ref[...],
                      preferred_element_type=jnp.float32)           # (Ho, Wo*Cout)
    bias_d = jnp.broadcast_to(b_ref[...].astype(jnp.float32), scale_d.shape)
    out = acc * scale_d + jnp.where(scale_d > 0.0, bias_d, 0.0)

    out_ref[0] = out.astype(out_ref.dtype)
    nmask_ref[0] = nonhole.astype(nmask_ref.dtype)


def partial_conv(x, mask, w_hwio, bias, *, padding=1, stride=1):
    """PartialConv forward. x/mask: (N,H,W,Cin), w: (K,K,Cin,Cout), bias: (Cout,)."""
    if stride != 1:
        raise NotImplementedError("stride != 1 not implemented")
    n, h, w, cin = x.shape
    kh, kw, wcin, cout = w_hwio.shape
    assert kh == kw and wcin == cin
    k = kh
    ho = h + 2 * padding - k + 1
    wo = w + 2 * padding - k + 1
    wc = w * cin

    # ---- one-time weight / layout preprocessing (wrapper-side plumbing) ----
    # Banded ("Toeplitz") weights: for kernel row dh, a (W*Cin, Wo*Cout) matrix
    # that applies all K horizontal taps and the horizontal zero padding in a
    # single lane-dense contraction:
    #   wband[dh, c*Cin+ci, j*Cout+co] = w[dh, c+pad-j, ci, co] if 0<=c+pad-j<K else 0
    cols = jnp.arange(w)[:, None]                     # input column c
    outs = jnp.arange(wo)[None, :]                    # output column j
    kw_idx = cols + padding - outs                    # (W, Wo)
    valid = (kw_idx >= 0) & (kw_idx < k)              # (W, Wo)
    kw_clip = jnp.clip(kw_idx, 0, k - 1)
    wg = w_hwio[:, kw_clip, :, :]                     # (K, W, Wo, Cin, Cout)
    wg = wg * valid[None, :, :, None, None].astype(w_hwio.dtype)
    wband = jnp.transpose(wg, (0, 1, 3, 2, 4)).reshape(k, wc, wo * cout)
    wband = wband.astype(jnp.float32)
    # Same band structure with all-ones weights, reduced over Cout -> (W*Cin, Wo).
    oband = jnp.broadcast_to(valid[:, None, :], (w, cin, wo))
    oband = oband.astype(jnp.float32).reshape(wc, wo)
    # Per-pixel -> per-(pixel, channel) lane broadcast matrix.
    bcast = jnp.repeat(jnp.eye(wo, dtype=jnp.float32), cout, axis=1)   # (Wo, Wo*Cout)
    bias_row = jnp.tile(bias.astype(jnp.float32), wo).reshape(1, wo * cout)

    # Lane-flatten (W, Cin) -> W*Cin (free, row-major metadata reshape).
    x2d = x.reshape(n, h, wc)
    m2d = mask.reshape(n, h, wc)

    kern = functools.partial(_partial_conv_kernel, H=h, WC=wc, Ho=ho, Wo=wo,
                             Cout=cout, K=k, pad=padding)
    out2d, nmask2d = pl.pallas_call(
        kern,
        out_shape=(jax.ShapeDtypeStruct((n, ho, wo * cout), x.dtype),
                   jax.ShapeDtypeStruct((n, ho, wo), x.dtype)),
        grid=(n,),
        in_specs=[
            pl.BlockSpec((1, h, wc), lambda i: (i, 0, 0)),           # input
            pl.BlockSpec((1, h, wc), lambda i: (i, 0, 0)),           # mask
            pl.BlockSpec((k, wc, wo * cout), lambda i: (0, 0, 0)),   # banded weight
            pl.BlockSpec((wc, wo), lambda i: (0, 0)),                # banded ones
            pl.BlockSpec((wo, wo * cout), lambda i: (0, 0)),         # lane broadcast
            pl.BlockSpec((1, wo * cout), lambda i: (0, 0)),          # bias row
        ],
        out_specs=(
            pl.BlockSpec((1, ho, wo * cout), lambda i: (i, 0, 0)),   # lane-dense out
            pl.BlockSpec((1, ho, wo), lambda i: (i, 0, 0)),          # per-pixel mask
        ),
        scratch_shapes=[
            pltpu.VMEM((h + 2 * padding, wc), jnp.float32),          # x*mask (row-padded)
            pltpu.VMEM((h + 2 * padding, wc), jnp.float32),          # mask   (row-padded)
        ],
        compiler_params=pltpu.CompilerParams(
            dimension_semantics=("parallel",)),   # batch independent; N>=2 keeps
                                                  # both v7x TensorCores busy
    )(x2d, m2d, wband, oband, bcast, bias_row)

    # Free layout plumbing outside the kernel.
    out = out2d.reshape(n, ho, wo, cout)
    new_mask = jnp.broadcast_to(nmask2d[..., None], (n, ho, wo, cout)).astype(x.dtype)
    return out, new_mask


# ---------------------------------------------------------------------------
# Pure-JAX reference (numerical verification only).
# ---------------------------------------------------------------------------
def partial_conv_ref(x, mask, w_hwio, bias, *, padding=1):
    dn = ("NHWC", "HWIO", "NHWC")
    pads = [(padding, padding), (padding, padding)]
    hp = lax.Precision.HIGHEST
    conv = lax.conv_general_dilated(x * mask, w_hwio, (1, 1), pads,
                                    dimension_numbers=dn, precision=hp)
    mconv = lax.conv_general_dilated(mask, jnp.ones_like(w_hwio), (1, 1), pads,
                                     dimension_numbers=dn, precision=hp)
    holes = mconv == 0.0
    mask_sum = jnp.where(holes, 1.0, mconv)
    b = bias.reshape(1, 1, 1, -1)
    out_pre = conv / mask_sum + b
    output = jnp.where(holes, 0.0, out_pre)
    new_mask = jnp.where(holes, 0.0, jnp.ones_like(output))
    return output, new_mask


if __name__ == "__main__":
    # PartialConv(in_channels=4, out_channels=8, kernel_size=3, stride=1,
    #             padding=1, dilation=1, groups=1, bias=True)
    N, CIN, H, W = 2, 4, 16, 16
    COUT, K, PAD = 8, 3, 1

    key = jax.random.PRNGKey(0)
    kx, km, kwgt, kb = jax.random.split(key, 4)
    # PyTorch-layout tensors (NCHW / OIHW); transposed to NHWC / HWIO below.
    x_nchw = jax.random.normal(kx, (N, CIN, H, W), jnp.float32)
    mask_nchw = (jax.random.uniform(km, (N, CIN, H, W)) > 0.3).astype(jnp.float32)
    hole = jnp.ones((H, W), jnp.float32).at[4:12, 4:12].set(0.0)
    mask_nchw = mask_nchw * hole[None, None]      # guaranteed all-zero hole region
    w_oihw = jax.random.normal(kwgt, (COUT, CIN, K, K), jnp.float32) * 0.1
    bias = jax.random.normal(kb, (COUT,), jnp.float32) * 0.1

    x = jnp.transpose(x_nchw, (0, 2, 3, 1))        # NHWC
    mask = jnp.transpose(mask_nchw, (0, 2, 3, 1))  # NHWC
    w_hwio = jnp.transpose(w_oihw, (2, 3, 1, 0))   # HWIO

    out, new_mask = partial_conv(x, mask, w_hwio, bias, padding=PAD)
    out = jax.block_until_ready(out)
    new_mask = jax.block_until_ready(new_mask)

    ref_out, ref_mask = partial_conv_ref(x, mask, w_hwio, bias, padding=PAD)
    assert out.shape == (N, H, W, COUT), out.shape
    assert new_mask.shape == (N, H, W, COUT), new_mask.shape
    max_err = float(jnp.max(jnp.abs(out - ref_out)))
    assert jnp.allclose(out, ref_out, atol=1e-4, rtol=1e-4), max_err
    assert bool(jnp.array_equal(new_mask, ref_mask))
    assert float(jnp.sum(1.0 - new_mask)) > 0.0    # hole path actually exercised

    print("KERNEL_OK")
</pallas_src>

<mosaic_0001>
module attributes {stable_mosaic.version = 11 : i64} {
  func.func @_partial_conv_kernel(%arg0: i32, %arg1: memref<1x16x64xf32, #tpu.memory_space<vmem>>, %arg2: memref<1x16x64xf32, #tpu.memory_space<vmem>>, %arg3: memref<3x64x128xf32, #tpu.memory_space<vmem>>, %arg4: memref<64x16xf32, #tpu.memory_space<vmem>>, %arg5: memref<16x128xf32, #tpu.memory_space<vmem>>, %arg6: memref<1x128xf32, #tpu.memory_space<vmem>>, %arg7: memref<1x16x128xf32, #tpu.memory_space<vmem>>, %arg8: memref<1x16x16xf32, #tpu.memory_space<vmem>>, %arg9: memref<18x64xf32, #tpu.memory_space<vmem>>, %arg10: memref<18x64xf32, #tpu.memory_space<vmem>>) attributes {dimension_semantics = [#tpu.dimension_semantics<parallel>], iteration_bounds = array<i64: 2>, scalar_prefetch = 0 : i64, scratch_operands = 2 : i64, tpu.core_type = #tpu.core_type<tc>, window_params = [{transform_indices = @transform_0, window_bounds = array<i64: 1, 16, 64>}, {transform_indices = @transform_1, window_bounds = array<i64: 1, 16, 64>}, {pipeline_mode = #tpu.pipeline_mode<synchronous>, transform_indices = @transform_2, window_bounds = array<i64: 3, 64, 128>}, {pipeline_mode = #tpu.pipeline_mode<synchronous>, transform_indices = @transform_3, window_bounds = array<i64: 64, 16>}, {pipeline_mode = #tpu.pipeline_mode<synchronous>, transform_indices = @transform_4, window_bounds = array<i64: 16, 128>}, {pipeline_mode = #tpu.pipeline_mode<synchronous>, transform_indices = @transform_5, window_bounds = array<i64: 1, 128>}, {transform_indices = @transform_6, window_bounds = array<i64: 1, 16, 128>}, {transform_indices = @transform_7, window_bounds = array<i64: 1, 16, 16>}]} {
    %c0 = arith.constant 0 : index
    %c0_0 = arith.constant 0 : index
    %c0_1 = arith.constant 0 : index
    %0 = vector.load %arg1[%c0, %c0_0, %c0_1] : memref<1x16x64xf32, #tpu.memory_space<vmem>>, vector<1x16x64xf32>
    %1 = vector.shape_cast %0 : vector<1x16x64xf32> to vector<16x64xf32>
    %c0_2 = arith.constant 0 : index
    %c0_3 = arith.constant 0 : index
    %c0_4 = arith.constant 0 : index
    %2 = vector.load %arg2[%c0_2, %c0_3, %c0_4] : memref<1x16x64xf32, #tpu.memory_space<vmem>>, vector<1x16x64xf32>
    %3 = vector.shape_cast %2 : vector<1x16x64xf32> to vector<16x64xf32>
    %cst = arith.constant 0.000000e+00 : f32
    %4 = vector.broadcast %cst : f32 to vector<1x64xf32>
    %c0_5 = arith.constant 0 : index
    %c0_6 = arith.constant 0 : index
    %5 = vector.load %arg9[%c0_5, %c0_6] : memref<18x64xf32, #tpu.memory_space<vmem>>, vector<1x64xf32>
    tpu.vector_store %arg9[%c0_5, %c0_6], %4 {strides = array<i32>} : memref<18x64xf32, #tpu.memory_space<vmem>>, vector<1x64xf32>,
    %c17 = arith.constant 17 : index
    %c0_7 = arith.constant 0 : index
    %6 = vector.load %arg9[%c17, %c0_7] : memref<18x64xf32, #tpu.memory_space<vmem>>, vector<1x64xf32>
    tpu.vector_store %arg9[%c17, %c0_7], %4 {strides = array<i32>} : memref<18x64xf32, #tpu.memory_space<vmem>>, vector<1x64xf32>,
    %c0_8 = arith.constant 0 : index
    %c0_9 = arith.constant 0 : index
    %7 = vector.load %arg10[%c0_8, %c0_9] : memref<18x64xf32, #tpu.memory_space<vmem>>, vector<1x64xf32>
    tpu.vector_store %arg10[%c0_8, %c0_9], %4 {strides = array<i32>} : memref<18x64xf32, #tpu.memory_space<vmem>>, vector<1x64xf32>,
    %c17_10 = arith.constant 17 : index
    %c0_11 = arith.constant 0 : index
    %8 = vector.load %arg10[%c17_10, %c0_11] : memref<18x64xf32, #tpu.memory_space<vmem>>, vector<1x64xf32>
    tpu.vector_store %arg10[%c17_10, %c0_11], %4 {strides = array<i32>} : memref<18x64xf32, #tpu.memory_space<vmem>>, vector<1x64xf32>,
    %9 = arith.mulf %1, %3 : vector<16x64xf32>
    %c1 = arith.constant 1 : index
    %c0_12 = arith.constant 0 : index
    %10 = vector.load %arg9[%c1, %c0_12] : memref<18x64xf32, #tpu.memory_space<vmem>>, vector<16x64xf32>
    tpu.vector_store %arg9[%c1, %c0_12], %9 {strides = array<i32>} : memref<18x64xf32, #tpu.memory_space<vmem>>, vector<16x64xf32>,
    %c1_13 = arith.constant 1 : index
    %c0_14 = arith.constant 0 : index
    %11 = vector.load %arg10[%c1_13, %c0_14] : memref<18x64xf32, #tpu.memory_space<vmem>>, vector<16x64xf32>
    tpu.vector_store %arg10[%c1_13, %c0_14], %3 {strides = array<i32>} : memref<18x64xf32, #tpu.memory_space<vmem>>, vector<16x64xf32>,
    %cst_15 = arith.constant 0.000000e+00 : f32
    %12 = vector.broadcast %cst_15 : f32 to vector<16x128xf32>
    %cst_16 = arith.constant 0.000000e+00 : f32
    %13 = vector.broadcast %cst_16 : f32 to vector<16x64xf32>
    %c0_17 = arith.constant 0 : index
    %c0_18 = arith.constant 0 : index
    %14 = vector.load %arg9[%c0_17, %c0_18] : memref<18x64xf32, #tpu.memory_space<vmem>>, vector<16x64xf32>
    %c0_19 = arith.constant 0 : index
    %c0_20 = arith.constant 0 : index
    %c0_21 = arith.constant 0 : index
    %15 = vector.load %arg3[%c0_19, %c0_20, %c0_21] : memref<3x64x128xf32, #tpu.memory_space<vmem>>, vector<1x64x128xf32>
    %16 = vector.shape_cast %15 : vector<1x64x128xf32> to vector<64x128xf32>
    %cst_22 = arith.constant dense<0.000000e+00> : vector<16x128xf32>
    %17 = tpu.matmul %14, %16, %cst_22 {dimension_numbers = #tpu.dot_dimension_numbers<[1], [0], [0], [1], [0, 0, 1, 1], [], []>} : vector<16x64xf32>, vector<64x128xf32>, vector<16x128xf32> -> vector<16x128xf32>
    %18 = arith.addf %12, %17 : vector<16x128xf32>
    %c0_23 = arith.constant 0 : index
    %c0_24 = arith.constant 0 : index
    %19 = vector.load %arg10[%c0_23, %c0_24] : memref<18x64xf32, #tpu.memory_space<vmem>>, vector<16x64xf32>
    %20 = arith.addf %13, %19 : vector<16x64xf32>
    %c1_25 = arith.constant 1 : index
    %c0_26 = arith.constant 0 : index
    %21 = vector.load %arg9[%c1_25, %c0_26] : memref<18x64xf32, #tpu.memory_space<vmem>>, vector<16x64xf32>
    %c1_27 = arith.constant 1 : index
    %c0_28 = arith.constant 0 : index
    %c0_29 = arith.constant 0 : index
    %22 = vector.load %arg3[%c1_27, %c0_28, %c0_29] : memref<3x64x128xf32, #tpu.memory_space<vmem>>, vector<1x64x128xf32>
    %23 = vector.shape_cast %22 : vector<1x64x128xf32> to vector<64x128xf32>
    %cst_30 = arith.constant dense<0.000000e+00> : vector<16x128xf32>
    %24 = tpu.matmul %21, %23, %cst_30 {dimension_numbers = #tpu.dot_dimension_numbers<[1], [0], [0], [1], [0, 0, 1, 1], [], []>} : vector<16x64xf32>, vector<64x128xf32>, vector<16x128xf32> -> vector<16x128xf32>
    %25 = arith.addf %18, %24 : vector<16x128xf32>
    %c1_31 = arith.constant 1 : index
    %c0_32 = arith.constant 0 : index
    %26 = vector.load %arg10[%c1_31, %c0_32] : memref<18x64xf32, #tpu.memory_space<vmem>>, vector<16x64xf32>
    %27 = arith.addf %20, %26 : vector<16x64xf32>
    %c2 = arith.constant 2 : index
    %c0_33 = arith.constant 0 : index
    %28 = vector.load %arg9[%c2, %c0_33] : memref<18x64xf32, #tpu.memory_space<vmem>>, vector<16x64xf32>
    %c2_34 = arith.constant 2 : index
    %c0_35 = arith.constant 0 : index
    %c0_36 = arith.constant 0 : index
    %29 = vector.load %arg3[%c2_34, %c0_35, %c0_36] : memref<3x64x128xf32, #tpu.memory_space<vmem>>, vector<1x64x128xf32>
    %30 = vector.shape_cast %29 : vector<1x64x128xf32> to vector<64x128xf32>
    %cst_37 = arith.constant dense<0.000000e+00> : vector<16x128xf32>
    %31 = tpu.matmul %28, %30, %cst_37 {dimension_numbers = #tpu.dot_dimension_numbers<[1], [0], [0], [1], [0, 0, 1, 1], [], []>} : vector<16x64xf32>, vector<64x128xf32>, vector<16x128xf32> -> vector<16x128xf32>
    %32 = arith.addf %25, %31 : vector<16x128xf32>
    %c2_38 = arith.constant 2 : index
    %c0_39 = arith.constant 0 : index
    %33 = vector.load %arg10[%c2_38, %c0_39] : memref<18x64xf32, #tpu.memory_space<vmem>>, vector<16x64xf32>
    %34 = arith.addf %27, %33 : vector<16x64xf32>
    %c0_40 = arith.constant 0 : index
    %c0_41 = arith.constant 0 : index
    %35 = vector.load %arg4[%c0_40, %c0_41] : memref<64x16xf32, #tpu.memory_space<vmem>>, vector<64x16xf32>
    %cst_42 = arith.constant dense<0.000000e+00> : vector<16x16xf32>
    %36 = tpu.matmul %34, %35, %cst_42 {dimension_numbers = #tpu.dot_dimension_numbers<[1], [0], [0], [1], [0, 0, 1, 1], [], []>} : vector<16x64xf32>, vector<64x16xf32>, vector<16x16xf32> -> vector<16x16xf32>
    %cst_43 = arith.constant 0.000000e+00 : f32
    %37 = vector.broadcast %cst_43 : f32 to vector<16x16xf32>
    %38 = arith.cmpf oeq, %36, %37 : vector<16x16xf32>
    %cst_44 = arith.constant 0.000000e+00 : f32
    %cst_45 = arith.constant 1.000000e+00 : f32
    %39 = vector.broadcast %cst_44 : f32 to vector<16x16xf32>
    %40 = vector.broadcast %cst_45 : f32 to vector<16x16xf32>
    %41 = arith.select %38, %39, %40 : vector<16x16xi1>, vector<16x16xf32>
    %cst_46 = arith.constant 1.000000e+00 : f32
    %42 = vector.broadcast %cst_46 : f32 to vector<16x16xf32>
    %43 = arith.select %38, %42, %36 : vector<16x16xi1>, vector<16x16xf32>
    %44 = tpu.reciprocal %43 : vector<16x16xf32> -> vector<16x16xf32>
    %45 = arith.mulf %41, %44 : vector<16x16xf32>
    %c0_47 = arith.constant 0 : index
    %c0_48 = arith.constant 0 : index
    %46 = vector.load %arg5[%c0_47, %c0_48] : memref<16x128xf32, #tpu.memory_space<vmem>>, vector<16x128xf32>
    %cst_49 = arith.constant dense<0.000000e+00> : vector<16x128xf32>
    %47 = tpu.matmul %45, %46, %cst_49 {dimension_numbers = #tpu.dot_dimension_numbers<[1], [0], [0], [1], [0, 0, 1, 1], [], []>} : vector<16x16xf32>, vector<16x128xf32>, vector<16x128xf32> -> vector<16x128xf32>
    %c0_50 = arith.constant 0 : index
    %c0_51 = arith.constant 0 : index
    %48 = vector.load %arg6[%c0_50, %c0_51] : memref<1x128xf32, #tpu.memory_space<vmem>>, vector<1x128xf32>
    %49 = vector.shape_cast %48 : vector<1x128xf32> to vector<1x128xf32>
    %50 = vector.broadcast %49 : vector<1x128xf32> to vector<16x128xf32>
    %51 = arith.mulf %32, %47 : vector<16x128xf32>
    %cst_52 = arith.constant 0.000000e+00 : f32
    %52 = vector.broadcast %cst_52 : f32 to vector<16x128xf32>
    %53 = arith.cmpf ogt, %47, %52 : vector<16x128xf32>
    %cst_53 = arith.constant 0.000000e+00 : f32
    %54 = vector.broadcast %cst_53 : f32 to vector<16x128xf32>
    %55 = arith.select %53, %50, %54 : vector<16x128xi1>, vector<16x128xf32>
    %56 = arith.addf %51, %55 : vector<16x128xf32>
    %c0_54 = arith.constant 0 : index
    %c0_55 = arith.constant 0 : index
    %c0_56 = arith.constant 0 : index
    %57 = vector.load %arg7[%c0_54, %c0_55, %c0_56] : memref<1x16x128xf32, #tpu.memory_space<vmem>>, vector<1x16x128xf32>
    %58 = vector.shape_cast %57 : vector<1x16x128xf32> to vector<16x128xf32>
    %59 = vector.shape_cast %56 : vector<16x128xf32> to vector<1x16x128xf32>
    tpu.vector_store %arg7[%c0_54, %c0_55, %c0_56], %59 {strides = array<i32>} : memref<1x16x128xf32, #tpu.memory_space<vmem>>, vector<1x16x128xf32>,
    %c0_57 = arith.constant 0 : index
    %c0_58 = arith.constant 0 : index
    %c0_59 = arith.constant 0 : index
    %60 = vector.load %arg8[%c0_57, %c0_58, %c0_59] : memref<1x16x16xf32, #tpu.memory_space<vmem>>, vector<1x16x16xf32>
    %61 = vector.shape_cast %60 : vector<1x16x16xf32> to vector<16x16xf32>
    %62 = vector.shape_cast %41 : vector<16x16xf32> to vector<1x16x16xf32>
    tpu.vector_store %arg8[%c0_57, %c0_58, %c0_59], %62 {strides = array<i32>} : memref<1x16x16xf32, #tpu.memory_space<vmem>>, vector<1x16x16xf32>,
    return
  }
  func.func @transform_0(%arg0: i32) -> (i32, i32, i32) {
    %c0_i32 = arith.constant 0 : i32
    %c0_i32_0 = arith.constant 0 : i32
    %c0_i32_1 = arith.constant 0 : i32
    return %arg0, %c0_i32, %c0_i32_0 : i32, i32, i32
  }
  func.func @transform_1(%arg0: i32) -> (i32, i32, i32) {
    %c0_i32 = arith.constant 0 : i32
    %c0_i32_0 = arith.constant 0 : i32
    %c0_i32_1 = arith.constant 0 : i32
    return %arg0, %c0_i32, %c0_i32_0 : i32, i32, i32
  }
  func.func @transform_2(%arg0: i32) -> (i32, i32, i32) {
    %c0_i32 = arith.constant 0 : i32
    %c0_i32_0 = arith.constant 0 : i32
    %c0_i32_1 = arith.constant 0 : i32
    %c0_i32_2 = arith.constant 0 : i32
    return %c0_i32, %c0_i32_0, %c0_i32_1 : i32, i32, i32
  }
  func.func @transform_3(%arg0: i32) -> (i32, i32) {
    %c0_i32 = arith.constant 0 : i32
    %c0_i32_0 = arith.constant 0 : i32
    %c0_i32_1 = arith.constant 0 : i32
    return %c0_i32, %c0_i32_0 : i32, i32
  }
  func.func @transform_4(%arg0: i32) -> (i32, i32) {
    %c0_i32 = arith.constant 0 : i32
    %c0_i32_0 = arith.constant 0 : i32
    %c0_i32_1 = arith.constant 0 : i32
    return %c0_i32, %c0_i32_0 : i32, i32
  }
  func.func @transform_5(%arg0: i32) -> (i32, i32) {
    %c0_i32 = arith.constant 0 : i32
    %c0_i32_0 = arith.constant 0 : i32
    %c0_i32_1 = arith.constant 0 : i32
    return %c0_i32, %c0_i32_0 : i32, i32
  }
  func.func @transform_6(%arg0: i32) -> (i32, i32, i32) {
    %c0_i32 = arith.constant 0 : i32
    %c0_i32_0 = arith.constant 0 : i32
    %c0_i32_1 = arith.constant 0 : i32
    return %arg0, %c0_i32, %c0_i32_0 : i32, i32, i32
  }
  func.func @transform_7(%arg0: i32) -> (i32, i32, i32) {
    %c0_i32 = arith.constant 0 : i32
    %c0_i32_0 = arith.constant 0 : i32
    %c0_i32_1 = arith.constant 0 : i32
    return %arg0, %c0_i32, %c0_i32_0 : i32, i32, i32
  }
}

</mosaic_0001>

<llo_original>
// kernel: tpu_custom_call.1
$region0: #{tpu_custom_call.1}
  #allocation0 [shape = 'u32[]', space=smem, size = 0x4, offset = 0x4, fixed_abs, tag = 'smem constant byte address 0x4 - core index']
  #allocation1 [shape = 'u32[144,128]{1,0:T(1,128)}', space=vmem, size = 0x12000, scoped, tag = 'internal scratch']
  #allocation2 [shape = 'f32[18,64]{1,0:T(8,128)}', space=vmem, size = 0x3000, scoped, tag = 'scratch operand']
  #allocation3 [shape = 'f32[18,64]{1,0:T(8,128)}', space=vmem, size = 0x3000, scoped, tag = 'scratch operand']
  %s0 = inlined_call_operand.vmem [shape: f32[2,16,64], index: 0, kind: input, shape index: {}]
  %s1 = inlined_call_operand.vmem [shape: f32[2,16,64], index: 1, kind: input, shape index: {}]
  %s2 = inlined_call_operand.hbm [shape: f32[3,64,128], index: 2, kind: input, shape index: {}]
  %s3 = inlined_call_operand.vmem [shape: f32[64,16], index: 3, kind: input, shape index: {}]
  %s4 = inlined_call_operand.vmem [shape: f32[16,128], index: 4, kind: input, shape index: {}]
  %s5 = inlined_call_operand.vmem [shape: f32[1,128], index: 5, kind: input, shape index: {}]
  %s6 = inlined_call_operand.hbm [shape: f32[2,16,128], index: 6, kind: output, shape index: {0}]
  %s7 = inlined_call_operand.hbm [shape: f32[2,16,16], index: 7, kind: output, shape index: {1}]
  %8 = xla_tuple %s6, %s7
  %s9 = sld [smem:[#allocation0]]
  $region69: #{tpu_custom_call.1} parent=0
    _
  %s11 = ssub.s32 1, %s9
  %s12 = scalar_select 0, %s11, %s9
  $region1: #{tpu_custom_call.1} parent=0
    #allocation4 [shape = 'u8[98304]{0}', space=vmem, size = 0x18000, scoped, tag = 'input window, operand 2, single buffered']
    #allocation5 [shape = 's32[2]{0}', space=sflag, size = 0x8, scoped, tag = 'scoped memory for tpu_custom_call.1']
    #allocation6 [shape = 's32[2]{0}', space=sflag, size = 0x8, scoped, tag = 'scoped memory for tpu_custom_call.1']
    #allocation7 [shape = 'u8[16384]{0}', space=vmem, size = 0x4000, scoped, tag = 'output window, operand 0']
    #allocation8 [shape = 'u8[16384]{0}', space=vmem, size = 0x4000, scoped, tag = 'output window, operand 1']
    #allocation9 [shape = 's32[2]{0}', space=sflag, size = 0x8, scoped, tag = 'scoped memory for tpu_custom_call.1']
    %13 = vsyncpa [#allocation5], 0
    %14 = vsyncpa [#allocation6], 0
    %s15 = scalar_lea.sflag [#allocation6], 1
    %16 = vsyncpa %s15, 0
    %17 = vsyncpa [#allocation9], 0
    %s18 = scalar_lea.sflag [#allocation9], 1
    %19 = vsyncpa %s18, 0
    loop: start=0, step=1, limit=4
    $region2: #{tpu_custom_call.1} parent=1 // loop_pre_header
      _
    $region3: #{tpu_custom_call.1} parent=1 // loop_header
      %s21 = sphi 0, %s25
      %p22 = scmp.ge.s32.totalorder %s21, 4
      %s31 = sphi 0, %s33
      %s34 = sphi 0, %s31
      %s35 = sphi 0, %s34
      %s51 = sphi 0, %s35
      %s57 = sphi 0, %s59
      %s60 = sphi 0, %s57
      %s61 = sphi 0, %s60
      %s77 = sphi 0, %s61
      %s81 = sphi 0, %s81
      %s83 = sphi 0, %s81
      %s84 = sphi 0, %s83
      %s98 = sphi 0, %s84
      %s102 = sphi 0, %s102
      %s104 = sphi 0, %s102
      %s105 = sphi 0, %s104
      %s119 = sphi 0, %s105
      %s123 = sphi 0, %s123
      %s125 = sphi 0, %s123
      %s126 = sphi 0, %s125
      %s140 = sphi 0, %s126
      %s144 = sphi 0, %s144
      %s146 = sphi 0, %s144
      %s147 = sphi 0, %s146
      %s161 = sphi 0, %s147
      %s167 = sphi 0, %s169
      %s170 = sphi 0, %s167
      %s171 = sphi 0, %s170
      %s187 = sphi 0, %s171
      %s193 = sphi 0, %s195
      %s196 = sphi 0, %s193
      %s197 = sphi 0, %s196
      %s213 = sphi 0, %s197
    $region4: #{tpu_custom_call.1} parent=1 // loop_header_branch
      %24 = sbr.rel (%p22) target = $region8
    $region5: #{tpu_custom_call.1} parent=1 // loop_body
      %s26 = ssub.s32 %s21, 1
      %s27 = ssub.s32 %s21, 2
      %s28 = sadd.s32 %s21, 1
      %s29 = ssub.s32 %s21, %s28
      %p30 = scmp.eq.s32.totalorder %s29, 0
      %s32 = sadd.s32 %s31, 1
      %s33 = scalar_select %p30, %s31, %s32
      %p36 = pneg %p30
      %p37 = scmp.eq.s32.totalorder %s21, 1
      %p38 = por %p36, %p37
      %p39 = scmp.ne.s32.totalorder %s31, %s34
      %p40 = scmp.eq.s32.totalorder %s21, 0
      %p41 = por %p39, %p40
      %p42 = scmp.ne.s32.totalorder %s31, %s34
      %p43 = scmp.eq.s32.totalorder %s26, 1
      %p44 = por %p42, %p43
      %p45 = scmp.ne.s32.totalorder %s34, %s35
      %p46 = scmp.eq.s32.totalorder %s26, 0
      %p47 = por %p45, %p46
      %p48 = scmp.ne.s32.totalorder %s34, %s35
      %p49 = scmp.eq.s32.totalorder %s27, 1
      %p50 = por %p48, %p49
      %p52 = scmp.ne.s32.totalorder %s35, %s51
      %p53 = scmp.eq.s32.totalorder %s27, 0
      %p54 = por %p52, %p53
      %s55 = ssub.s32 %s21, %s28
      %p56 = scmp.eq.s32.totalorder %s55, 0
      %s58 = sadd.s32 %s57, 1
      %s59 = scalar_select %p56, %s57, %s58
      %p62 = pneg %p56
      %p63 = scmp.eq.s32.totalorder %s21, 1
      %p64 = por %p62, %p63
      %p65 = scmp.ne.s32.totalorder %s57, %s60
      %p66 = scmp.eq.s32.totalorder %s21, 0
      %p67 = por %p65, %p66
      %p68 = scmp.ne.s32.totalorder %s57, %s60
      %p69 = scmp.eq.s32.totalorder %s26, 1
      %p70 = por %p68, %p69
      %p71 = scmp.ne.s32.totalorder %s60, %s61
      %p72 = scmp.eq.s32.totalorder %s26, 0
      %p73 = por %p71, %p72
      %p74 = scmp.ne.s32.totalorder %s60, %s61
      %p75 = scmp.eq.s32.totalorder %s27, 1
      %p76 = por %p74, %p75
      %p78 = scmp.ne.s32.totalorder %s61, %s77
      %p79 = scmp.eq.s32.totalorder %s27, 0
      %p80 = por %p78, %p79
      %s82 = sadd.s32 %s81, 1
      %p85 = scmp.eq.s32.totalorder %s21, 1
      %p86 = scmp.ne.s32.totalorder %s81, %s83
      %p87 = scmp.eq.s32.totalorder %s21, 0
      %p88 = por %p86, %p87
      %p89 = scmp.ne.s32.totalorder %s81, %s83
      %p90 = scmp.eq.s32.totalorder %s26, 1
      %p91 = por %p89, %p90
      %p92 = scmp.ne.s32.totalorder %s83, %s84
      %p93 = scmp.eq.s32.totalorder %s26, 0
      %p94 = por %p92, %p93
      %p95 = scmp.ne.s32.totalorder %s83, %s84
      %p96 = scmp.eq.s32.totalorder %s27, 1
      %p97 = por %p95, %p96
      %p99 = scmp.ne.s32.totalorder %s84, %s98
      %p100 = scmp.eq.s32.totalorder %s27, 0
      %p101 = por %p99, %p100
      %s103 = sadd.s32 %s102, 1
      %p106 = scmp.eq.s32.totalorder %s21, 1
      %p107 = scmp.ne.s32.totalorder %s102, %s104
      %p108 = scmp.eq.s32.totalorder %s21, 0
      %p109 = por %p107, %p108
      %p110 = scmp.ne.s32.totalorder %s102, %s104
      %p111 = scmp.eq.s32.totalorder %s26, 1
      %p112 = por %p110, %p111
      %p113 = scmp.ne.s32.totalorder %s104, %s105
      %p114 = scmp.eq.s32.totalorder %s26, 0
      %p115 = por %p113, %p114
      %p116 = scmp.ne.s32.totalorder %s104, %s105
      %p117 = scmp.eq.s32.totalorder %s27, 1
      %p118 = por %p116, %p117
      %p120 = scmp.ne.s32.totalorder %s105, %s119
      %p121 = scmp.eq.s32.totalorder %s27, 0
      %p122 = por %p120, %p121
      %s124 = sadd.s32 %s123, 1
      %p127 = scmp.eq.s32.totalorder %s21, 1
      %p128 = scmp.ne.s32.totalorder %s123, %s125
      %p129 = scmp.eq.s32.totalorder %s21, 0
      %p130 = por %p128, %p129
      %p131 = scmp.ne.s32.totalorder %s123, %s125
      %p132 = scmp.eq.s32.totalorder %s26, 1
      %p133 = por %p131, %p132
      %p134 = scmp.ne.s32.totalorder %s125, %s126
      %p135 = scmp.eq.s32.totalorder %s26, 0
      %p136 = por %p134, %p135
      %p137 = scmp.ne.s32.totalorder %s125, %s126
      %p138 = scmp.eq.s32.totalorder %s27, 1
      %p139 = por %p137, %p138
      %p141 = scmp.ne.s32.totalorder %s126, %s140
      %p142 = scmp.eq.s32.totalorder %s27, 0
      %p143 = por %p141, %p142
      %s145 = sadd.s32 %s144, 1
      %p148 = scmp.eq.s32.totalorder %s21, 1
      %p149 = scmp.ne.s32.totalorder %s144, %s146
      %p150 = scmp.eq.s32.totalorder %s21, 0
      %p151 = por %p149, %p150
      %p152 = scmp.ne.s32.totalorder %s144, %s146
      %p153 = scmp.eq.s32.totalorder %s26, 1
      %p154 = por %p152, %p153
      %p155 = scmp.ne.s32.totalorder %s146, %s147
      %p156 = scmp.eq.s32.totalorder %s26, 0
      %p157 = por %p155, %p156
      %p158 = scmp.ne.s32.totalorder %s146, %s147
      %p159 = scmp.eq.s32.totalorder %s27, 1
      %p160 = por %p158, %p159
      %p162 = scmp.ne.s32.totalorder %s147, %s161
      %p163 = scmp.eq.s32.totalorder %s27, 0
      %p164 = por %p162, %p163
      %s165 = ssub.s32 %s21, %s28
      %p166 = scmp.eq.s32.totalorder %s165, 0
      %s168 = sadd.s32 %s167, 1
      %s169 = scalar_select %p166, %s167, %s168
      %p172 = pneg %p166
      %p173 = scmp.eq.s32.totalorder %s21, 1
      %p174 = por %p172, %p173
      %p175 = scmp.ne.s32.totalorder %s167, %s170
      %p176 = scmp.eq.s32.totalorder %s21, 0
      %p177 = por %p175, %p176
      %p178 = scmp.ne.s32.totalorder %s167, %s170
      %p179 = scmp.eq.s32.totalorder %s26, 1
      %p180 = por %p178, %p179
      %p181 = scmp.ne.s32.totalorder %s170, %s171
      %p182 = scmp.eq.s32.totalorder %s26, 0
      %p183 = por %p181, %p182
      %p184 = scmp.ne.s32.totalorder %s170, %s171
      %p185 = scmp.eq.s32.totalorder %s27, 1
      %p186 = por %p184, %p185
      %p188 = scmp.ne.s32.totalorder %s171, %s187
      %p189 = scmp.eq.s32.totalorder %s27, 0
      %p190 = por %p188, %p189
      %s191 = ssub.s32 %s21, %s28
      %p192 = scmp.eq.s32.totalorder %s191, 0
      %s194 = sadd.s32 %s193, 1
      %s195 = scalar_select %p192, %s193, %s194
      %p198 = pneg %p192
      %p199 = scmp.eq.s32.totalorder %s21, 1
      %p200 = por %p198, %p199
      %p201 = scmp.ne.s32.totalorder %s193, %s196
      %p202 = scmp.eq.s32.totalorder %s21, 0
      %p203 = por %p201, %p202
      %p204 = scmp.ne.s32.totalorder %s193, %s196
      %p205 = scmp.eq.s32.totalorder %s26, 1
      %p206 = por %p204, %p205
      %p207 = scmp.ne.s32.totalorder %s196, %s197
      %p208 = scmp.eq.s32.totalorder %s26, 0
      %p209 = por %p207, %p208
      %p210 = scmp.ne.s32.totalorder %s196, %s197
      %p211 = scmp.eq.s32.totalorder %s27, 1
      %p212 = por %p210, %p211
      %p214 = scmp.ne.s32.totalorder %s197, %s213
      %p215 = scmp.eq.s32.totalorder %s27, 0
      %p216 = por %p214, %p215
      %p217 = scmp.le.s32.totalorder 1, %s21
      %p218 = scmp.lt.s32.totalorder %s21, 3
      %p219 = pnand %p217, %p218
      %p220 = pneg %p219
      // Predicated region
      $region9: #{tpu_custom_call.1} parent=5 // pred_check
        _
      $region10: #{tpu_custom_call.1} parent=5 // pred_check_branch
        %222 = sbr.rel (%p219) target = $region12
      $region11: #{tpu_custom_call.1} parent=5 // pred_region
        %s223 = ssub.s32 %s21, 1
        // Predicated region
        $region13: #{tpu_custom_call.1} parent=11 // pred_check
          %p224 = pneg %p94
        $region14: #{tpu_custom_call.1} parent=11 // pred_check_branch
          %226 = sbr.rel (%p224) target = $region16
        $region15: #{tpu_custom_call.1} parent=11 // pred_region
          %s228 = ssub.s32 3072, 3072
          %229 = vsyncadd [#allocation5], %s228
          %s230 = sshll.u32 [#allocation4], 4
          %s231 = int_to_ptr.vmem [resolvable:$true] %s230
          %236 = dma.hbm_to_vmem [thread:$0]  %s2, 3072, %s231, [#allocation5], 128, 128, 8
        $region16: #{tpu_custom_call.1} parent=11 // pred_fallthru
          _
        // Predicated region
        $region17: #{tpu_custom_call.1} parent=11 // pred_check
          %p237 = pneg %p115
        $region18: #{tpu_custom_call.1} parent=11 // pred_check_branch
          %239 = sbr.rel (%p237) target = $region20
        $region19: #{tpu_custom_call.1} parent=11 // pred_region
          _
        $region20: #{tpu_custom_call.1} parent=11 // pred_fallthru
          _
        // Predicated region
        $region21: #{tpu_custom_call.1} parent=11 // pred_check
          %p240 = pneg %p136
        $region22: #{tpu_custom_call.1} parent=11 // pred_check_branch
          %242 = sbr.rel (%p240) target = $region24
        $region23: #{tpu_custom_call.1} parent=11 // pred_region
          _
        $region24: #{tpu_custom_call.1} parent=11 // pred_fallthru
          _
        // Predicated region
        $region25: #{tpu_custom_call.1} parent=11 // pred_check
          %p243 = pneg %p157
        $region26: #{tpu_custom_call.1} parent=11 // pred_check_branch
          %245 = sbr.rel (%p243) target = $region28
        $region27: #{tpu_custom_call.1} parent=11 // pred_region
          _
        $region28: #{tpu_custom_call.1} parent=11 // pred_fallthru
          _
      $region12: #{tpu_custom_call.1} parent=5 // pred_fallthru
        _
      %p246 = scmp.lt.s32.totalorder %s21, 2
      // Predicated region
      $region29: #{tpu_custom_call.1} parent=5 // pred_check
        %p247 = pneg %p246
      $region30: #{tpu_custom_call.1} parent=5 // pred_check_branch
        %249 = sbr.rel (%p247) target = $region32
      $region31: #{tpu_custom_call.1} parent=5 // pred_region
        // Predicated region
        $region33: #{tpu_custom_call.1} parent=31 // pred_check
          %p250 = pneg %p41
        $region34: #{tpu_custom_call.1} parent=31 // pred_check_branch
          %252 = sbr.rel (%p250) target = $region36
        $region35: #{tpu_custom_call.1} parent=31 // pred_region
          %p253 = scmp.lt.s32.totalorder %s21, 1
          %s254 = scalar_select %p253, %s21, 1
          %s255 = smul.addr %s254, 2
          %s256 = smul.addr %s255, 8
          %s257 = scalar_lea.vmem %s0, %s256
        $region36: #{tpu_custom_call.1} parent=31 // pred_fallthru
          _
        // Predicated region
        $region37: #{tpu_custom_call.1} parent=31 // pred_check
          %p258 = pneg %p67
        $region38: #{tpu_custom_call.1} parent=31 // pred_check_branch
          %260 = sbr.rel (%p258) target = $region40
        $region39: #{tpu_custom_call.1} parent=31 // pred_region
          %p261 = scmp.lt.s32.totalorder %s21, 1
          %s262 = scalar_select %p261, %s21, 1
          %s263 = smul.addr %s262, 2
          %s264 = smul.addr %s263, 8
          %s265 = scalar_lea.vmem %s1, %s264
        $region40: #{tpu_custom_call.1} parent=31 // pred_fallthru
          _
      $region32: #{tpu_custom_call.1} parent=5 // pred_fallthru
        _
      %p266 = scmp.le.s32.totalorder 1, %s21
      %p267 = scmp.lt.s32.totalorder %s21, 3
      %p268 = pnand %p266, %p267
      %p269 = pneg %p268
      // Predicated region
      $region41: #{tpu_custom_call.1} parent=5 // pred_check
        _
      $region42: #{tpu_custom_call.1} parent=5 // pred_check_branch
        %271 = sbr.rel (%p268) target = $region44
      $region43: #{tpu_custom_call.1} parent=5 // pred_region
        %s272 = ssub.s32 %s21, 1
        // Predicated region
        $region45: #{tpu_custom_call.1} parent=43 // pred_check
          %p273 = pneg %p94
        $region46: #{tpu_custom_call.1} parent=43 // pred_check_branch
          %275 = sbr.rel (%p273) target = $region48
        $region47: #{tpu_custom_call.1} parent=43 // pred_region
          %276 = dma.done [#allocation5], 3072
        $region48: #{tpu_custom_call.1} parent=43 // pred_fallthru
          _
        %p277 = scmp.lt.s32.totalorder %s26, 1
        %s278 = scalar_select %p277, %s26, 1
        %s279 = smul.addr %s278, 2
        %s280 = smul.addr %s279, 8
        %s281 = scalar_lea.vmem %s0, %s280
        %p282 = pneg %p47
        %p283 = pneg %p44
        %p284 = scmp.lt.s32.totalorder %s26, 1
        %s285 = scalar_select %p284, %s26, 1
        %s286 = smul.addr %s285, 2
        %s287 = smul.addr %s286, 8
        %s288 = scalar_lea.vmem %s1, %s287
        %p289 = pneg %p73
        %p290 = pneg %p70
        %p291 = pneg %p94
        %p292 = pneg %p91
        %p293 = pneg %p115
        %p294 = pneg %p112
        %p295 = pneg %p136
        %p296 = pneg %p133
        %p297 = pneg %p157
        %p298 = pneg %p154
        %p299 = pneg %p183
        %p300 = pneg %p180
        %s301 = sand.u32 %s170, 1
        %s302 = scalar_lea.sflag [#allocation6], %s301
        %s303 = sand.u32 %s170, 1
        %s304 = smul.addr %s303, 16
        %s305 = scalar_lea.vmem [#allocation7], %s304
        %p306 = pneg %p209
        %p307 = pneg %p206
        %s308 = sand.u32 %s196, 1
        %s309 = scalar_lea.sflag [#allocation9], %s308
        %s310 = sand.u32 %s196, 1
        %s311 = smul.addr %s310, 16
        %s312 = scalar_lea.vmem [#allocation8], %s311
        %p313 = scmp.lt.s32.totalorder %s26, 1
        %s314 = scalar_select %p313, %s26, 1
        %s315 = smul.addr %s314, 2
        %s316 = smul.addr %s315, 8
        %s317 = scalar_lea.vmem %s0, %s316
        %p318 = scmp.lt.s32.totalorder %s26, 1
        %s319 = scalar_select %p318, %s26, 1
        %s320 = smul.addr %s319, 2
        %s321 = smul.addr %s320, 8
        %s322 = scalar_lea.vmem %s1, %s321
        %v323 = vld [vmem:[%s317] sm:$0xff]
        %v324 = vld [vmem:[%s317 + $0x8] sm:$0xff]
        %v325 = vld [vmem:[%s322] sm:$0xff]
        %v326 = vld [vmem:[%s322 + $0x8] sm:$0xff]
        %vm327 = vcmask 516096
        %328 = vst.msk [vmem:[#allocation2] sm:$0x1] %vm327, 0.0
        %329 = vst.msk [vmem:[#allocation2 + $0x11] sm:$0x1] %vm327, 0.0
        %330 = vst.msk [vmem:[#allocation3] sm:$0x1] %vm327, 0.0
        %331 = vst.msk [vmem:[#allocation3 + $0x11] sm:$0x1] %vm327, 0.0
        %v332 = vmul.f32 %v323, %v325
        %v333 = vmul.f32 %v324, %v326
        %vm334 = vcmask 523264
        %335 = vst.msk [vmem:[#allocation2 + $0x1] sm:$0xff] %vm334, %v332
        %336 = vst.msk [vmem:[#allocation2 + $0x9] sm:$0xff] %vm334, %v333
        %337 = vst.msk [vmem:[#allocation3 + $0x1] sm:$0xff] %vm334, %v325
        %338 = vst.msk [vmem:[#allocation3 + $0x9] sm:$0xff] %vm334, %v326
        %v339 = vld [vmem:[#allocation2] sm:$0xff]
        %v340 = vld [vmem:[#allocation2 + $0x8] sm:$0xff]
        %v341 = vld [vmem:[#allocation4] sm:$0xff]
        %v342 = vld [vmem:[#allocation4 + $0x8] sm:$0xff]
        %v343 = vld [vmem:[#allocation4 + $0x10] sm:$0xff]
        %v344 = vld [vmem:[#allocation4 + $0x18] sm:$0xff]
        %v345 = vld [vmem:[#allocation4 + $0x20] sm:$0xff]
        %v346 = vld [vmem:[#allocation4 + $0x28] sm:$0xff]
        %v347 = vld [vmem:[#allocation4 + $0x30] sm:$0xff]
        %v348 = vld [vmem:[#allocation4 + $0x38] sm:$0xff]
        %v349 = vld [vmem:[#allocation3] sm:$0xff]
        %v350 = vld [vmem:[#allocation3 + $0x8] sm:$0xff]
        %v351 = vadd.f32 %v349, 0.0
        %v352 = vadd.f32 %v350, 0.0
        %v353 = vld [vmem:[#allocation2 + $0x1] sm:$0xff]
        %v354 = vld [vmem:[#allocation2 + $0x9] sm:$0xff]
        %s355 = scalar_lea.vmem [#allocation4], 64
        %v356 = vld [vmem:[%s355] sm:$0xff]
        %v357 = vld [vmem:[%s355 + $0x8] sm:$0xff]
        %v358 = vld [vmem:[%s355 + $0x10] sm:$0xff]
        %v359 = vld [vmem:[%s355 + $0x18] sm:$0xff]
        %v360 = vld [vmem:[%s355 + $0x20] sm:$0xff]
        %v361 = vld [vmem:[%s355 + $0x28] sm:$0xff]
        %v362 = vld [vmem:[%s355 + $0x30] sm:$0xff]
        %v363 = vld [vmem:[%s355 + $0x38] sm:$0xff]
        %v365 = vsel %vm334, %v353, 0
        %v368 = vsel %vm334, %v354, 0
        %370 = vmatprep.subr.mxu0 0.0
        %371 = vmatpush1.msra.mxu0 %v356
        %372 = vmatprep.subr.mxu0 0.0
        %373 = vmatpush1.msra.mxu0 %v357
        %374 = vmatprep.subr.mxu0 0.0
        %375 = vmatpush1.msra.mxu0 %v358
        %376 = vmatprep.subr.mxu0 0.0
        %377 = vmatpush1.msra.mxu0 %v359
        %378 = vmatprep.subr.mxu0 0.0
        %379 = vmatpush1.msra.mxu0 %v360
        %380 = vmatprep.subr.mxu0 0.0
        %381 = vmatpush1.msra.mxu0 %v361
        %382 = vmatprep.subr.mxu0 0.0
        %383 = vmatpush1.msra.mxu0 %v362
        %384 = vmatprep.subr.mxu0 0.0
        %385 = vmatpush1.msra.mxu0 %v363
        %386 = vmatprep.subr.mxu0 0.0
        %387 = vmatpush1.msra.mxu0 0.0
        %388 = vmatprep.subr.mxu0 0.0
        %389 = vmatpush1.msra.mxu0 0.0
        %390 = vmatprep.subr.mxu0 0.0
        %391 = vmatpush1.msra.mxu0 0.0
        %392 = vmatprep.subr.mxu0 0.0
        %393 = vmatpush1.msra.mxu0 0.0
        %394 = vmatprep.subr.mxu0 0.0
        %395 = vmatpush1.msra.mxu0 0.0
        %396 = vmatprep.subr.mxu0 0.0
        %397 = vmatpush1.msra.mxu0 0.0
        %398 = vmatprep.subr.mxu0 0.0
        %399 = vmatpush1.msra.mxu0 0.0
        %400 = vmatprep.subr.mxu0 0.0
        %401 = vmatpush1.msra.mxu0 0.0
        %402 = vmatprep.subr.mxu0 0.0
        %403 = vmatpush1.msra.mxu0 0.0
        %404 = vmatprep.subr.mxu0 0.0
        %405 = vmatpush1.msra.mxu0 0.0
        %406 = vmatprep.subr.mxu0 0.0
        %407 = vmatpush1.msra.mxu0 0.0
        %408 = vmatprep.subr.mxu0 0.0
        %409 = vmatpush1.msra.mxu0 0.0
        %410 = vmatprep.subr.mxu0 0.0
        %411 = vmatpush1.msra.mxu0 0.0
        %412 = vmatprep.subr.mxu0 0.0
        %413 = vmatpush1.msra.mxu0 0.0
        %414 = vmatprep.subr.mxu0 0.0
        %415 = vmatpush1.msra.mxu0 0.0
        %416 = vmatprep.subr.mxu0 0.0
        %417 = vmatpush1.msra.mxu0 0.0
        %418 = vmatprep.subr.mxu0 0.0
        %419 = vmatpush1.msra.mxu0 0.0
        %420 = vmatprep.subr.mxu0 0.0
        %421 = vmatpush1.msra.mxu0 0.0
        %422 = vmatprep.subr.mxu0 0.0
        %423 = vmatpush1.msra.mxu0 0.0
        %424 = vmatprep.subr.mxu0 0.0
        %425 = vmatpush1.msra.mxu0 0.0
        %426 = vmatprep.subr.mxu0 0.0
        %427 = vmatpush1.msra.mxu0 0.0
        %428 = vmatprep.subr.mxu0 0.0
        %429 = vmatpush1.msra.mxu0 0.0
        %430 = vmatprep.subr.mxu0 0.0
        %431 = vmatpush1.msra.mxu0 0.0
        %432 = vmatprep.subr.mxu0 0.0
        %433 = vmatpush1.msra.mxu0 0.0
        %434 = vmatprep.mubr.f32.mxu0 0.0
        %435 = vmatmul.mubr.f32.gmra.mrb[0].mxu0 %v365
        %v436 = vpop.f32.mrb[0].mxu0
        %v437 = vadd.f32 0.0, %v436
        %v438 = vpop.f32.mrb[0].mxu0
        %439 = vmatprep.mubr.f32.mxu0 0.0
        %440 = vmatmul.mubr.f32.gmra.mrb[0].mxu0 %v368
        %v441 = vpop.f32.mrb[0].mxu0
        %v442 = vadd.f32 0.0, %v441
        %v443 = vpop.f32.mrb[0].mxu0
        %444 = vdwg.mxu0
        %v446 = vsel %vm334, %v339, 0
        %v449 = vsel %vm334, %v340, 0
        %451 = vmatprep.subr.mxu0 0.0
        %452 = vmatpush1.msra.mxu0 %v341
        %453 = vmatprep.subr.mxu0 0.0
        %454 = vmatpush1.msra.mxu0 %v342
        %455 = vmatprep.subr.mxu0 0.0
        %456 = vmatpush1.msra.mxu0 %v343
        %457 = vmatprep.subr.mxu0 0.0
        %458 = vmatpush1.msra.mxu0 %v344
        %459 = vmatprep.subr.mxu0 0.0
        %460 = vmatpush1.msra.mxu0 %v345
        %461 = vmatprep.subr.mxu0 0.0
        %462 = vmatpush1.msra.mxu0 %v346
        %463 = vmatprep.subr.mxu0 0.0
        %464 = vmatpush1.msra.mxu0 %v347
        %465 = vmatprep.subr.mxu0 0.0
        %466 = vmatpush1.msra.mxu0 %v348
        %467 = vmatprep.subr.mxu0 0.0
        %468 = vmatpush1.msra.mxu0 0.0
        %469 = vmatprep.subr.mxu0 0.0
        %470 = vmatpush1.msra.mxu0 0.0
        %471 = vmatprep.subr.mxu0 0.0
        %472 = vmatpush1.msra.mxu0 0.0
        %473 = vmatprep.subr.mxu0 0.0
        %474 = vmatpush1.msra.mxu0 0.0
        %475 = vmatprep.subr.mxu0 0.0
        %476 = vmatpush1.msra.mxu0 0.0
        %477 = vmatprep.subr.mxu0 0.0
        %478 = vmatpush1.msra.mxu0 0.0
        %479 = vmatprep.subr.mxu0 0.0
        %480 = vmatpush1.msra.mxu0 0.0
        %481 = vmatprep.subr.mxu0 0.0
        %482 = vmatpush1.msra.mxu0 0.0
        %483 = vmatprep.subr.mxu0 0.0
        %484 = vmatpush1.msra.mxu0 0.0
        %485 = vmatprep.subr.mxu0 0.0
        %486 = vmatpush1.msra.mxu0 0.0
        %487 = vmatprep.subr.mxu0 0.0
        %488 = vmatpush1.msra.mxu0 0.0
        %489 = vmatprep.subr.mxu0 0.0
        %490 = vmatpush1.msra.mxu0 0.0
        %491 = vmatprep.subr.mxu0 0.0
        %492 = vmatpush1.msra.mxu0 0.0
        %493 = vmatprep.subr.mxu0 0.0
        %494 = vmatpush1.msra.mxu0 0.0
        %495 = vmatprep.subr.mxu0 0.0
        %496 = vmatpush1.msra.mxu0 0.0
        %497 = vmatprep.subr.mxu0 0.0
        %498 = vmatpush1.msra.mxu0 0.0
        %499 = vmatprep.subr.mxu0 0.0
        %500 = vmatpush1.msra.mxu0 0.0
        %501 = vmatprep.subr.mxu0 0.0
        %502 = vmatpush1.msra.mxu0 0.0
        %503 = vmatprep.subr.mxu0 0.0
        %504 = vmatpush1.msra.mxu0 0.0
        %505 = vmatprep.subr.mxu0 0.0
        %506 = vmatpush1.msra.mxu0 0.0
        %507 = vmatprep.subr.mxu0 0.0
        %508 = vmatpush1.msra.mxu0 0.0
        %509 = vmatprep.subr.mxu0 0.0
        %510 = vmatpush1.msra.mxu0 0.0
        %511 = vmatprep.subr.mxu0 0.0
        %512 = vmatpush1.msra.mxu0 0.0
        %513 = vmatprep.subr.mxu0 0.0
        %514 = vmatpush1.msra.mxu0 0.0
        %515 = vmatprep.mubr.f32.mxu0 0.0
        %516 = vmatmul.mubr.f32.gmra.mrb[0].mxu0 %v446
        %v517 = vpop.f32.mrb[0].mxu0
        %v518 = vadd.f32 %v437, %v517
        %v519 = vpop.f32.mrb[0].mxu0
        %520 = vmatprep.mubr.f32.mxu0 0.0
        %521 = vmatmul.mubr.f32.gmra.mrb[0].mxu0 %v449
        %v522 = vpop.f32.mrb[0].mxu0
        %v523 = vadd.f32 %v442, %v522
        %v524 = vpop.f32.mrb[0].mxu0
        %525 = vdwg.mxu0
        %v526 = vld [vmem:[#allocation3 + $0x1] sm:$0xff]
        %v527 = vld [vmem:[#allocation3 + $0x9] sm:$0xff]
        %v528 = vadd.f32 %v351, %v526
        %v529 = vadd.f32 %v352, %v527
        %v530 = vld [vmem:[#allocation2 + $0x2] sm:$0xff]
        %v531 = vld [vmem:[#allocation2 + $0xa] sm:$0xff]
        %s532 = scalar_lea.vmem [#allocation4], 128
        %v533 = vld [vmem:[%s532] sm:$0xff]
        %v534 = vld [vmem:[%s532 + $0x8] sm:$0xff]
        %v535 = vld [vmem:[%s532 + $0x10] sm:$0xff]
        %v536 = vld [vmem:[%s532 + $0x18] sm:$0xff]
        %v537 = vld [vmem:[%s532 + $0x20] sm:$0xff]
        %v538 = vld [vmem:[%s532 + $0x28] sm:$0xff]
        %v539 = vld [vmem:[%s532 + $0x30] sm:$0xff]
        %v540 = vld [vmem:[%s532 + $0x38] sm:$0xff]
        %v542 = vsel %vm334, %v530, 0
        %v545 = vsel %vm334, %v531, 0
        %547 = vmatprep.subr.mxu0 0.0
        %548 = vmatpush1.msra.mxu0 %v533
        %549 = vmatprep.subr.mxu0 0.0
        %550 = vmatpush1.msra.mxu0 %v534
        %551 = vmatprep.subr.mxu0 0.0
        %552 = vmatpush1.msra.mxu0 %v535
        %553 = vmatprep.subr.mxu0 0.0
        %554 = vmatpush1.msra.mxu0 %v536
        %555 = vmatprep.subr.mxu0 0.0
        %556 = vmatpush1.msra.mxu0 %v537
        %557 = vmatprep.subr.mxu0 0.0
        %558 = vmatpush1.msra.mxu0 %v538
        %559 = vmatprep.subr.mxu0 0.0
        %560 = vmatpush1.msra.mxu0 %v539
        %561 = vmatprep.subr.mxu0 0.0
        %562 = vmatpush1.msra.mxu0 %v540
        %563 = vmatprep.subr.mxu0 0.0
        %564 = vmatpush1.msra.mxu0 0.0
        %565 = vmatprep.subr.mxu0 0.0
        %566 = vmatpush1.msra.mxu0 0.0
        %567 = vmatprep.subr.mxu0 0.0
        %568 = vmatpush1.msra.mxu0 0.0
        %569 = vmatprep.subr.mxu0 0.0
        %570 = vmatpush1.msra.mxu0 0.0
        %571 = vmatprep.subr.mxu0 0.0
        %572 = vmatpush1.msra.mxu0 0.0
        %573 = vmatprep.subr.mxu0 0.0
        %574 = vmatpush1.msra.mxu0 0.0
        %575 = vmatprep.subr.mxu0 0.0
        %576 = vmatpush1.msra.mxu0 0.0
        %577 = vmatprep.subr.mxu0 0.0
        %578 = vmatpush1.msra.mxu0 0.0
        %579 = vmatprep.subr.mxu0 0.0
        %580 = vmatpush1.msra.mxu0 0.0
        %581 = vmatprep.subr.mxu0 0.0
        %582 = vmatpush1.msra.mxu0 0.0
        %583 = vmatprep.subr.mxu0 0.0
        %584 = vmatpush1.msra.mxu0 0.0
        %585 = vmatprep.subr.mxu0 0.0
        %586 = vmatpush1.msra.mxu0 0.0
        %587 = vmatprep.subr.mxu0 0.0
        %588 = vmatpush1.msra.mxu0 0.0
        %589 = vmatprep.subr.mxu0 0.0
        %590 = vmatpush1.msra.mxu0 0.0
        %591 = vmatprep.subr.mxu0 0.0
        %592 = vmatpush1.msra.mxu0 0.0
        %593 = vmatprep.subr.mxu0 0.0
        %594 = vmatpush1.msra.mxu0 0.0
        %595 = vmatprep.subr.mxu0 0.0
        %596 = vmatpush1.msra.mxu0 0.0
        %597 = vmatprep.subr.mxu0 0.0
        %598 = vmatpush1.msra.mxu0 0.0
        %599 = vmatprep.subr.mxu0 0.0
        %600 = vmatpush1.msra.mxu0 0.0
        %601 = vmatprep.subr.mxu0 0.0
        %602 = vmatpush1.msra.mxu0 0.0
        %603 = vmatprep.subr.mxu0 0.0
        %604 = vmatpush1.msra.mxu0 0.0
        %605 = vmatprep.subr.mxu0 0.0
        %606 = vmatpush1.msra.mxu0 0.0
        %607 = vmatprep.subr.mxu0 0.0
        %608 = vmatpush1.msra.mxu0 0.0
        %609 = vmatprep.subr.mxu0 0.0
        %610 = vmatpush1.msra.mxu0 0.0
        %611 = vmatprep.mubr.f32.mxu0 0.0
        %612 = vmatmul.mubr.f32.gmra.mrb[0].mxu0 %v542
        %v613 = vpop.f32.mrb[0].mxu0
        %v614 = vadd.f32 0.0, %v613
        %v615 = vpop.f32.mrb[0].mxu0
        %616 = vmatprep.mubr.f32.mxu0 0.0
        %617 = vmatmul.mubr.f32.gmra.mrb[0].mxu0 %v545
        %v618 = vpop.f32.mrb[0].mxu0
        %v619 = vadd.f32 0.0, %v618
        %v620 = vpop.f32.mrb[0].mxu0
        %621 = vdwg.mxu0
        %v622 = vadd.f32 %v518, %v614
        %v623 = vadd.f32 %v523, %v619
        %v624 = vld [vmem:[#allocation3 + $0x2] sm:$0xff]
        %v625 = vld [vmem:[#allocation3 + $0xa] sm:$0xff]
        %v626 = vadd.f32 %v528, %v624
        %v627 = vadd.f32 %v529, %v625
        %v628 = vld [vmem:[%s3] sm:$0xff]
        %v629 = vld [vmem:[%s3 + $0x8] sm:$0xff]
        %v630 = vld [vmem:[%s3 + $0x10] sm:$0xff]
        %v631 = vld [vmem:[%s3 + $0x18] sm:$0xff]
        %v632 = vld [vmem:[%s3 + $0x20] sm:$0xff]
        %v633 = vld [vmem:[%s3 + $0x28] sm:$0xff]
        %v634 = vld [vmem:[%s3 + $0x30] sm:$0xff]
        %v635 = vld [vmem:[%s3 + $0x38] sm:$0xff]
        %v637 = vsel %vm334, %v626, 0
        %v640 = vsel %vm334, %v627, 0
        %642 = vmatprep.subr.mxu0 0.0
        %643 = vmatpush1.msra.mxu0 %v628
        %644 = vmatprep.subr.mxu0 0.0
        %645 = vmatpush1.msra.mxu0 %v629
        %646 = vmatprep.subr.mxu0 0.0
        %647 = vmatpush1.msra.mxu0 %v630
        %648 = vmatprep.subr.mxu0 0.0
        %649 = vmatpush1.msra.mxu0 %v631
        %650 = vmatprep.subr.mxu0 0.0
        %651 = vmatpush1.msra.mxu0 %v632
        %652 = vmatprep.subr.mxu0 0.0
        %653 = vmatpush1.msra.mxu0 %v633
        %654 = vmatprep.subr.mxu0 0.0
        %655 = vmatpush1.msra.mxu0 %v634
        %656 = vmatprep.subr.mxu0 0.0
        %657 = vmatpush1.msra.mxu0 %v635
        %658 = vmatprep.subr.mxu0 0.0
        %659 = vmatpush1.msra.mxu0 0.0
        %660 = vmatprep.subr.mxu0 0.0
        %661 = vmatpush1.msra.mxu0 0.0
        %662 = vmatprep.subr.mxu0 0.0
        %663 = vmatpush1.msra.mxu0 0.0
        %664 = vmatprep.subr.mxu0 0.0
        %665 = vmatpush1.msra.mxu0 0.0
        %666 = vmatprep.subr.mxu0 0.0
        %667 = vmatpush1.msra.mxu0 0.0
        %668 = vmatprep.subr.mxu0 0.0
        %669 = vmatpush1.msra.mxu0 0.0
        %670 = vmatprep.subr.mxu0 0.0
        %671 = vmatpush1.msra.mxu0 0.0
        %672 = vmatprep.subr.mxu0 0.0
        %673 = vmatpush1.msra.mxu0 0.0
        %674 = vmatprep.subr.mxu0 0.0
        %675 = vmatpush1.msra.mxu0 0.0
        %676 = vmatprep.subr.mxu0 0.0
        %677 = vmatpush1.msra.mxu0 0.0
        %678 = vmatprep.subr.mxu0 0.0
        %679 = vmatpush1.msra.mxu0 0.0
        %680 = vmatprep.subr.mxu0 0.0
        %681 = vmatpush1.msra.mxu0 0.0
        %682 = vmatprep.subr.mxu0 0.0
        %683 = vmatpush1.msra.mxu0 0.0
        %684 = vmatprep.subr.mxu0 0.0
        %685 = vmatpush1.msra.mxu0 0.0
        %686 = vmatprep.subr.mxu0 0.0
        %687 = vmatpush1.msra.mxu0 0.0
        %688 = vmatprep.subr.mxu0 0.0
        %689 = vmatpush1.msra.mxu0 0.0
        %690 = vmatprep.subr.mxu0 0.0
        %691 = vmatpush1.msra.mxu0 0.0
        %692 = vmatprep.subr.mxu0 0.0
        %693 = vmatpush1.msra.mxu0 0.0
        %694 = vmatprep.subr.mxu0 0.0
        %695 = vmatpush1.msra.mxu0 0.0
        %696 = vmatprep.subr.mxu0 0.0
        %697 = vmatpush1.msra.mxu0 0.0
        %698 = vmatprep.subr.mxu0 0.0
        %699 = vmatpush1.msra.mxu0 0.0
        %700 = vmatprep.subr.mxu0 0.0
        %701 = vmatpush1.msra.mxu0 0.0
        %702 = vmatprep.subr.mxu0 0.0
        %703 = vmatpush1.msra.mxu0 0.0
        %704 = vmatprep.subr.mxu0 0.0
        %705 = vmatpush1.msra.mxu0 0.0
        %706 = vmatprep.mubr.f32.mxu0 0.0
        %707 = vmatmul.mubr.f32.gmra.mrb[0].mxu0 %v637
        %v708 = vpop.f32.mrb[0].mxu0
        %v709 = vadd.f32 0.0, %v708
        %v710 = vpop.f32.mrb[0].mxu0
        %711 = vmatprep.mubr.f32.mxu0 0.0
        %712 = vmatmul.mubr.f32.gmra.mrb[0].mxu0 %v640
        %v713 = vpop.f32.mrb[0].mxu0
        %v714 = vadd.f32 0.0, %v713
        %v715 = vpop.f32.mrb[0].mxu0
        %716 = vdwg.mxu0
        %vm717 = vcmp.eq.f32.partialorder %v709, 0.0
        %vm718 = vcmp.eq.f32.partialorder %v714, 0.0
        %v719 = vsel %vm717, 0.0, 1.0
        %v720 = vsel %vm718, 0.0, 1.0
        %v721 = vsel %vm717, 1.0, %v709
        %v722 = vsel %vm718, 1.0, %v714
        %v723 = vrcp.pop %v721
        %v724 = vrcp.pop %v722
        %v725 = vmul.f32 %v719, %v723
        %v726 = vmul.f32 %v720, %v724
        %v727 = vld [vmem:[%s4] sm:$0xff]
        %v728 = vld [vmem:[%s4 + $0x8] sm:$0xff]
        %vm729 = vcmask 130048
        %v731 = vsel %vm729, %v725, 0
        %v734 = vsel %vm729, %v726, 0
        %736 = vmatprep.subr.mxu0 0.0
        %737 = vmatpush1.msra.mxu0 %v727
        %738 = vmatprep.subr.mxu0 0.0
        %739 = vmatpush1.msra.mxu0 %v728
        %740 = vmatprep.subr.mxu0 0.0
        %741 = vmatpush1.msra.mxu0 0.0
        %742 = vmatprep.subr.mxu0 0.0
        %743 = vmatpush1.msra.mxu0 0.0
        %744 = vmatprep.subr.mxu0 0.0
        %745 = vmatpush1.msra.mxu0 0.0
        %746 = vmatprep.subr.mxu0 0.0
        %747 = vmatpush1.msra.mxu0 0.0
        %748 = vmatprep.subr.mxu0 0.0
        %749 = vmatpush1.msra.mxu0 0.0
        %750 = vmatprep.subr.mxu0 0.0
        %751 = vmatpush1.msra.mxu0 0.0
        %752 = vmatprep.subr.mxu0 0.0
        %753 = vmatpush1.msra.mxu0 0.0
        %754 = vmatprep.subr.mxu0 0.0
        %755 = vmatpush1.msra.mxu0 0.0
        %756 = vmatprep.subr.mxu0 0.0
        %757 = vmatpush1.msra.mxu0 0.0
        %758 = vmatprep.subr.mxu0 0.0
        %759 = vmatpush1.msra.mxu0 0.0
        %760 = vmatprep.subr.mxu0 0.0
        %761 = vmatpush1.msra.mxu0 0.0
        %762 = vmatprep.subr.mxu0 0.0
        %763 = vmatpush1.msra.mxu0 0.0
        %764 = vmatprep.subr.mxu0 0.0
        %765 = vmatpush1.msra.mxu0 0.0
        %766 = vmatprep.subr.mxu0 0.0
        %767 = vmatpush1.msra.mxu0 0.0
        %768 = vmatprep.subr.mxu0 0.0
        %769 = vmatpush1.msra.mxu0 0.0
        %770 = vmatprep.subr.mxu0 0.0
        %771 = vmatpush1.msra.mxu0 0.0
        %772 = vmatprep.subr.mxu0 0.0
        %773 = vmatpush1.msra.mxu0 0.0
        %774 = vmatprep.subr.mxu0 0.0
        %775 = vmatpush1.msra.mxu0 0.0
        %776 = vmatprep.subr.mxu0 0.0
        %777 = vmatpush1.msra.mxu0 0.0
        %778 = vmatprep.subr.mxu0 0.0
        %779 = vmatpush1.msra.mxu0 0.0
        %780 = vmatprep.subr.mxu0 0.0
        %781 = vmatpush1.msra.mxu0 0.0
        %782 = vmatprep.subr.mxu0 0.0
        %783 = vmatpush1.msra.mxu0 0.0
        %784 = vmatprep.subr.mxu0 0.0
        %785 = vmatpush1.msra.mxu0 0.0
        %786 = vmatprep.subr.mxu0 0.0
        %787 = vmatpush1.msra.mxu0 0.0
        %788 = vmatprep.subr.mxu0 0.0
        %789 = vmatpush1.msra.mxu0 0.0
        %790 = vmatprep.subr.mxu0 0.0
        %791 = vmatpush1.msra.mxu0 0.0
        %792 = vmatprep.subr.mxu0 0.0
        %793 = vmatpush1.msra.mxu0 0.0
        %794 = vmatprep.subr.mxu0 0.0
        %795 = vmatpush1.msra.mxu0 0.0
        %796 = vmatprep.subr.mxu0 0.0
        %797 = vmatpush1.msra.mxu0 0.0
        %798 = vmatprep.subr.mxu0 0.0
        %799 = vmatpush1.msra.mxu0 0.0
        %800 = vmatprep.mubr.f32.mxu0 0.0
        %801 = vmatmul.mubr.f32.gmra.mrb[0].mxu0 %v731
        %v802 = vpop.f32.mrb[0].mxu0
        %v803 = vadd.f32 0.0, %v802
        %v804 = vpop.f32.mrb[0].mxu0
        %805 = vmatprep.mubr.f32.mxu0 0.0
        %806 = vmatmul.mubr.f32.gmra.mrb[0].mxu0 %v734
        %v807 = vpop.f32.mrb[0].mxu0
        %v808 = vadd.f32 0.0, %v807
        %v809 = vpop.f32.mrb[0].mxu0
        %810 = vdwg.mxu0
        %v811 = vld [vmem:[%s5] sm:$0x1]
        %v813 = vlaneseq
        %v814 = vshrl.u32 %v813, 7
        %v815 = vsub.s32 0, %v814
        %v816 = vrot.slane %v811, %v815
        %v818 = vmul.f32 %v622, %v803
        %v819 = vmul.f32 %v623, %v808
        %vm820 = vcmp.gt.f32.partialorder %v803, 0.0
        %vm821 = vcmp.gt.f32.partialorder %v808, 0.0
        %v822 = vsel %vm820, %v816, 0.0
        %v823 = vsel %vm821, %v816, 0.0
        %v824 = vadd.f32 %v818, %v822
        %v825 = vadd.f32 %v819, %v823
        %826 = vst [vmem:[%s305] sm:$0xff] %v824
        %827 = vst [vmem:[%s305 + $0x8] sm:$0xff] %v825
        %828 = vst.msk [vmem:[%s312] sm:$0xff] %vm729, %v719
        %829 = vst.msk [vmem:[%s312 + $0x8] sm:$0xff] %vm729, %v720
        %s830 = sand.u32 %s170, 1
        %s831 = scalar_lea.sflag [#allocation6], %s830
        %s832 = sand.u32 %s170, 1
        %s833 = smul.addr %s832, 16
        %s834 = scalar_lea.vmem [#allocation7], %s833
        %s835 = sand.u32 %s196, 1
        %s836 = scalar_lea.sflag [#allocation9], %s835
        %s837 = sand.u32 %s196, 1
        %s838 = smul.addr %s837, 16
        %s839 = scalar_lea.vmem [#allocation8], %s838
        // Predicated region
        $region49: #{tpu_custom_call.1} parent=43 // pred_check
          %p840 = pneg %p180
        $region50: #{tpu_custom_call.1} parent=43 // pred_check_branch
          %842 = sbr.rel (%p840) target = $region52
        $region51: #{tpu_custom_call.1} parent=43 // pred_region
          %s844 = ssub.s32 256, 256
          %845 = vsyncadd %s831, %s844
          %s846 = smul.addr %s26, 2
          %s847 = smul.addr %s846, 128
          %s848 = scalar_lea.hbm %s6, %s847
          %s849 = sshll.u32 %s834, 4
          %s850 = int_to_ptr.vmem [resolvable:$true] %s849
          %855 = dma.vmem_to_hbm [thread:$0]  %s850, 256, %s848, %s831, 128, 128, 8
        $region52: #{tpu_custom_call.1} parent=43 // pred_fallthru
          _
        // Predicated region
        $region53: #{tpu_custom_call.1} parent=43 // pred_check
          %p856 = pneg %p206
        $region54: #{tpu_custom_call.1} parent=43 // pred_check_branch
          %858 = sbr.rel (%p856) target = $region56
        $region55: #{tpu_custom_call.1} parent=43 // pred_region
          %s860 = ssub.s32 256, 256
          %861 = vsyncadd %s836, %s860
          %s862 = smul.addr %s26, 2
          %s863 = smul.addr %s862, 128
          %s864 = scalar_lea.hbm %s7, %s863
          %s865 = sshll.u32 %s839, 4
          %s866 = int_to_ptr.vmem [resolvable:$true] %s865
          %871 = dma.vmem_to_hbm [thread:$0]  %s866, 256, %s864, %s836, 128, 128, 8
        $region56: #{tpu_custom_call.1} parent=43 // pred_fallthru
          _
      $region44: #{tpu_custom_call.1} parent=5 // pred_fallthru
        _
      %p872 = scmp.le.s32.totalorder 2, %s21
      // Predicated region
      $region57: #{tpu_custom_call.1} parent=5 // pred_check
        %p873 = pneg %p872
      $region58: #{tpu_custom_call.1} parent=5 // pred_check_branch
        %875 = sbr.rel (%p873) target = $region60
      $region59: #{tpu_custom_call.1} parent=5 // pred_region
        %s876 = ssub.s32 %s21, 2
        // Predicated region
        $region61: #{tpu_custom_call.1} parent=59 // pred_check
          %p877 = pneg %p186
        $region62: #{tpu_custom_call.1} parent=59 // pred_check_branch
          %879 = sbr.rel (%p877) target = $region64
        $region63: #{tpu_custom_call.1} parent=59 // pred_region
          %s880 = sand.u32 %s171, 1
          %s881 = scalar_lea.sflag [#allocation6], %s880
          %s882 = sand.u32 %s171, 1
          %s883 = smul.addr %s882, 16
          %s884 = scalar_lea.vmem [#allocation7], %s883
          %885 = dma.done %s881, 256
        $region64: #{tpu_custom_call.1} parent=59 // pred_fallthru
          _
        // Predicated region
        $region65: #{tpu_custom_call.1} parent=59 // pred_check
          %p886 = pneg %p212
        $region66: #{tpu_custom_call.1} parent=59 // pred_check_branch
          %888 = sbr.rel (%p886) target = $region68
        $region67: #{tpu_custom_call.1} parent=59 // pred_region
          %s889 = sand.u32 %s197, 1
          %s890 = scalar_lea.sflag [#allocation9], %s889
          %s891 = sand.u32 %s197, 1
          %s892 = smul.addr %s891, 16
          %s893 = scalar_lea.vmem [#allocation8], %s892
          %894 = dma.done %s890, 256
        $region68: #{tpu_custom_call.1} parent=59 // pred_fallthru
          _
      $region60: #{tpu_custom_call.1} parent=5 // pred_fallthru
        _
    $region6: #{tpu_custom_call.1} parent=1 // loop_footer
      %s25 = sadd.s32 1, %s21
    $region7: #{tpu_custom_call.1} parent=1 // loop_footer_branch
      %20 = sbr.rel target = $region3
    $region8: #{tpu_custom_call.1} parent=1 // loop_exit
      _
    %895 = vsyncpa [#allocation5], 1
    %s896 = scalar_lea.sflag [#allocation5], 1
    %897 = vsyncpa %s896, 1
    %898 = vsyncpa [#allocation6], 1
    %s899 = scalar_lea.sflag [#allocation6], 1
    %900 = vsyncpa %s899, 1
    %901 = vsyncpa [#allocation9], 1
    %s902 = scalar_lea.sflag [#allocation9], 1
    %903 = vsyncpa %s902, 1

</llo_original>
